<compile_context>
chip_gen: v7x
topology: tpu7x:2x2x1
jax: 0.10.0
libtpu: 0.0.40
codegen_flags: <defaults>
</compile_context>

<pallas_src>
import functools

import jax
import jax.numpy as jnp
from jax.experimental import pallas as pl
from jax.experimental.pallas import tpu as pltpu


def _round_up(x, m):
    return ((x + m - 1) // m) * m


def _rmsnorm_gated_kernel(x_ref, g_ref, w_ref, o_ref, *, eps, inv_n,
                          faithful_cast, approx_sigmoid):
    # Upcast to f32 (matches hidden_states.to(torch.float32)).
    x = x_ref[...].astype(jnp.float32)
    g = g_ref[...].astype(jnp.float32)
    # SiLU gate: x * g * sigmoid(g).
    if approx_sigmoid:
        # exp and the reciprocal both land on the EUP slot -> frees VALU (v7x).
        sig = pl.reciprocal(1.0 + jnp.exp(-g), approx=True)
    else:
        sig = jax.nn.sigmoid(g)
    x = x * (g * sig)
    # variance = mean(x^2, -1); hidden is the full (unpadded) lane extent.
    var = jnp.sum(x * x, axis=-1, keepdims=True) * inv_n
    x = x * jax.lax.rsqrt(var + eps)
    if faithful_cast and x_ref.dtype != jnp.float32:
        # Faithful to PyTorch: round normalized states to the input dtype before
        # multiplying by the f32 weight.  (Identity round-trip for f32 inputs.)
        x = x.astype(x_ref.dtype).astype(jnp.float32)
    o_ref[...] = (w_ref[...] * x).astype(o_ref.dtype)


def _rmsnorm_kernel(x_ref, w_ref, o_ref, *, eps, inv_n, faithful_cast):
    x = x_ref[...].astype(jnp.float32)
    var = jnp.sum(x * x, axis=-1, keepdims=True) * inv_n
    x = x * jax.lax.rsqrt(var + eps)
    if faithful_cast and x_ref.dtype != jnp.float32:
        x = x.astype(x_ref.dtype).astype(jnp.float32)
    o_ref[...] = (w_ref[...] * x).astype(o_ref.dtype)


def mamba_rmsnorm_gated(hidden_states, weight, gate=None, eps=1e-6,
                        row_tile=None, out_dtype=None, faithful_cast=True,
                        approx_sigmoid=True):
    """Pallas implementation of MambaRMSNormGated.forward.

    hidden_states:  (..., hidden)
    gate:           (..., hidden) or None
    weight:         (hidden,)
    row_tile:       optional explicit row-tile override (sweep knob).
    out_dtype:      output dtype; default f32 (f32 weight * states, like PyTorch).
                    Pass hidden_states.dtype for a lower-HBM-traffic output.
    faithful_cast:  keep the PyTorch cast of normalized states to the input dtype.
    approx_sigmoid: use the EUP approximate reciprocal for sigmoid.
    """
    orig_shape = hidden_states.shape
    hidden = orig_shape[-1]
    rows = 1
    for d in orig_shape[:-1]:
        rows *= d

    x_dtype = hidden_states.dtype
    if out_dtype is None:
        # PyTorch: f32 weight * states.to(input_dtype) -> f32 output.
        out_dtype = jnp.promote_types(x_dtype, jnp.float32)
    out_dtype = jnp.dtype(out_dtype)

    x_b = jnp.dtype(x_dtype).itemsize
    g_b = jnp.dtype(gate.dtype).itemsize if gate is not None else 0
    o_b = out_dtype.itemsize

    # Row-tile granularity: sublane packing of the narrowest streamed dtype
    # (8 rows f32, 16 bf16/f16, 32 int8/fp8).
    min_b = min(b for b in (x_b, g_b, o_b) if b > 0)
    sub = max(8, 32 // min_b)

    hbm_bytes_per_row = hidden * (x_b + g_b + o_b)
    # Per-row VMEM: double-buffered x/gate/out tiles + ~8 f32 live temps
    # (upcasts, silu product, x^2, normalized, weighted).  Conservative so a
    # tile that fits here also fits v7x's 64 MiB VMEM without spilling.
    vmem_bytes_per_row = hidden * (2 * (x_b + g_b + o_b) + 8 * 4)

    try:
        vmem_cap = int(pltpu.get_tpu_info().vmem_capacity_bytes)
    except Exception:
        vmem_cap = 64 * 1024 * 1024  # conservative fallback (v7x per-TC VMEM)

    if row_tile is None:
        # Target >= ~4 MiB of HBM traffic per grid step so the ~0.35us per-step
        # overhead is amortized regardless of hidden size; cap by a 50%-headroom
        # VMEM budget and a few thousand rows (diminishing returns beyond).
        tm = pl.cdiv(4 * 1024 * 1024, hbm_bytes_per_row)
        tm = min(tm, (vmem_cap // 2) // max(vmem_bytes_per_row, 1), 4096)
    else:
        tm = int(row_tile)
    tm = max(sub, (tm // sub) * sub)
    tm = min(tm, _round_up(rows, sub))

    steps = pl.cdiv(rows, tm)
    # v7x megacore: the single "parallel" axis shards across two TensorCores;
    # keep small grids even so both cores get equal work (harmless elsewhere).
    if rows > sub and steps <= 16 and (steps < 2 or steps % 2 == 1):
        steps = max(2, steps + (steps % 2))
        tm = max(sub, _round_up(pl.cdiv(rows, steps), sub))
        steps = pl.cdiv(rows, tm)
    grid = (steps,)

    vmem_limit = min(int(vmem_cap * 0.9),
                     max(tm * vmem_bytes_per_row + (4 << 20), 32 << 20))

    x2d = hidden_states.reshape(rows, hidden)
    w2d = weight.astype(jnp.float32).reshape(1, hidden)

    row_spec = pl.BlockSpec((tm, hidden), lambda i: (i, 0))
    w_spec = pl.BlockSpec((1, hidden), lambda i: (0, 0))

    compiler_params = pltpu.CompilerParams(
        dimension_semantics=("parallel",),
        vmem_limit_bytes=int(vmem_limit),
    )
    inv_n = 1.0 / float(hidden)

    if gate is not None:
        g2d = gate.reshape(rows, hidden)
        kernel = functools.partial(_rmsnorm_gated_kernel, eps=float(eps),
                                   inv_n=inv_n, faithful_cast=faithful_cast,
                                   approx_sigmoid=approx_sigmoid)
        in_specs = [row_spec, row_spec, w_spec]
        args = (x2d, g2d, w2d)
    else:
        kernel = functools.partial(_rmsnorm_kernel, eps=float(eps),
                                   inv_n=inv_n, faithful_cast=faithful_cast)
        in_specs = [row_spec, w_spec]
        args = (x2d, w2d)

    out = pl.pallas_call(
        kernel,
        out_shape=jax.ShapeDtypeStruct((rows, hidden), out_dtype),
        grid_spec=pltpu.PrefetchScalarGridSpec(
            num_scalar_prefetch=0,
            grid=grid,
            in_specs=in_specs,
            out_specs=row_spec,
        ),
        compiler_params=compiler_params,
    )(*args)

    return out.reshape(orig_shape[:-1] + (hidden,))


def _reference(hidden_states, weight, gate=None, eps=1e-6):
    input_dtype = hidden_states.dtype
    x = hidden_states.astype(jnp.float32)
    if gate is not None:
        g = gate.astype(jnp.float32)
        x = x * (g * jax.nn.sigmoid(g))
    var = jnp.mean(x * x, axis=-1, keepdims=True)
    x = x * jax.lax.rsqrt(var + eps)
    return weight.astype(jnp.float32) * x.astype(input_dtype)


if __name__ == "__main__":
    eps = 1e-6
    key = jax.random.PRNGKey(0)
    k1, k2, k3, k4 = jax.random.split(key, 4)

    # --- small f32 case (hidden < 128 exercises the full-extent lane block) ---
    batch, seq, hidden = 2, 8, 32
    hidden_states = jax.random.normal(k1, (batch, seq, hidden), dtype=jnp.float32)
    gate = jax.random.normal(k2, (batch, seq, hidden), dtype=jnp.float32)
    weight = jnp.ones((hidden,), dtype=jnp.float32)  # nn.Parameter(torch.ones(hidden_size))

    out_gated = mamba_rmsnorm_gated(hidden_states, weight, gate=gate, eps=eps)
    out_exact = mamba_rmsnorm_gated(hidden_states, weight, gate=gate, eps=eps,
                                    approx_sigmoid=False)
    out_plain = mamba_rmsnorm_gated(hidden_states, weight, gate=None, eps=eps)
    jax.block_until_ready((out_gated, out_exact, out_plain))

    ref_gated = _reference(hidden_states, weight, gate=gate, eps=eps)
    ref_plain = _reference(hidden_states, weight, gate=None, eps=eps)

    assert out_gated.shape == (batch, seq, hidden)
    # Approx-sigmoid path (EUP reciprocal) is accurate to ~1e-4 relative.
    assert jnp.allclose(out_gated, ref_gated, atol=1e-2, rtol=1e-2)
    # Exact-sigmoid path matches tightly.
    assert jnp.allclose(out_exact, ref_gated, atol=1e-5, rtol=1e-5)
    assert jnp.allclose(out_plain, ref_plain, atol=1e-5, rtol=1e-5)

    # --- bf16 case with non-divisible rows (ragged last block, no host padding) ---
    b2, s2, h2 = 3, 5, 96
    x_bf16 = jax.random.normal(k3, (b2, s2, h2), dtype=jnp.bfloat16)
    g_bf16 = jax.random.normal(k4, (b2, s2, h2), dtype=jnp.bfloat16)
    w2 = jnp.ones((h2,), dtype=jnp.float32)

    out_bf16 = mamba_rmsnorm_gated(x_bf16, w2, gate=g_bf16, eps=eps)
    jax.block_until_ready(out_bf16)
    ref_bf16 = _reference(x_bf16, w2, gate=g_bf16, eps=eps)
    assert out_bf16.shape == (b2, s2, h2)
    assert out_bf16.dtype == jnp.float32  # f32 weight * bf16 states -> f32 (PyTorch)
    assert jnp.allclose(out_bf16, ref_bf16, atol=2e-2, rtol=2e-2)

    # --- bf16-out fast path (out_dtype knob): ~25% fewer HBM bytes on v5e/v6e ---
    out_fast = mamba_rmsnorm_gated(x_bf16, w2, gate=g_bf16, eps=eps,
                                   out_dtype=jnp.bfloat16)
    jax.block_until_ready(out_fast)
    assert out_fast.dtype == jnp.bfloat16
    assert jnp.allclose(out_fast.astype(jnp.float32), ref_bf16, atol=3e-2, rtol=3e-2)

    print("KERNEL_OK")
</pallas_src>

<mosaic_0001>
module attributes {stable_mosaic.version = 11 : i64} {
  func.func @_rmsnorm_gated_kernel(%arg0: i32, %arg1: memref<8x32xf32, #tpu.memory_space<vmem>>, %arg2: memref<8x32xf32, #tpu.memory_space<vmem>>, %arg3: memref<1x32xf32, #tpu.memory_space<vmem>>, %arg4: memref<8x32xf32, #tpu.memory_space<vmem>>) attributes {dimension_semantics = [#tpu.dimension_semantics<parallel>], iteration_bounds = array<i64: 2>, scalar_prefetch = 0 : i64, scratch_operands = 0 : i64, tpu.core_type = #tpu.core_type<tc>, window_params = [{transform_indices = @transform_0, window_bounds = array<i64: 8, 32>}, {transform_indices = @transform_1, window_bounds = array<i64: 8, 32>}, {pipeline_mode = #tpu.pipeline_mode<synchronous>, transform_indices = @transform_2, window_bounds = array<i64: 1, 32>}, {transform_indices = @transform_3, window_bounds = array<i64: 8, 32>}]} {
    %c0 = arith.constant 0 : index
    %c0_0 = arith.constant 0 : index
    %0 = vector.load %arg1[%c0, %c0_0] : memref<8x32xf32, #tpu.memory_space<vmem>>, vector<8x32xf32>
    %c0_1 = arith.constant 0 : index
    %c0_2 = arith.constant 0 : index
    %1 = vector.load %arg2[%c0_1, %c0_2] : memref<8x32xf32, #tpu.memory_space<vmem>>, vector<8x32xf32>
    %cst = arith.constant 0.000000e+00 : f32
    %2 = vector.broadcast %cst : f32 to vector<8x32xf32>
    %3 = arith.subf %2, %1 : vector<8x32xf32>
    %4 = math.exp %3 : vector<8x32xf32>
    %cst_3 = arith.constant 1.000000e+00 : f32
    %5 = vector.broadcast %cst_3 : f32 to vector<8x32xf32>
    %6 = arith.addf %5, %4 : vector<8x32xf32>
    %7 = tpu.reciprocal %6 {approx = true} : vector<8x32xf32> -> vector<8x32xf32>
    %8 = arith.mulf %1, %7 : vector<8x32xf32>
    %9 = arith.mulf %0, %8 : vector<8x32xf32>
    %10 = arith.mulf %9, %9 : vector<8x32xf32>
    %cst_4 = arith.constant dense<0.000000e+00> : vector<8xf32>
    %11 = vector.multi_reduction <add>, %10, %cst_4 [1] : vector<8x32xf32> to vector<8xf32>
    %12 = vector.shape_cast %11 : vector<8xf32> to vector<8x1xf32>
    %cst_5 = arith.constant 3.125000e-02 : f32
    %13 = vector.broadcast %cst_5 : f32 to vector<8x1xf32>
    %14 = arith.mulf %12, %13 : vector<8x1xf32>
    %cst_6 = arith.constant 9.99999997E-7 : f32
    %15 = vector.broadcast %cst_6 : f32 to vector<8x1xf32>
    %16 = arith.addf %14, %15 : vector<8x1xf32>
    %17 = math.rsqrt %16 : vector<8x1xf32>
    %18 = vector.broadcast %17 : vector<8x1xf32> to vector<8x32xf32>
    %19 = arith.mulf %9, %18 : vector<8x32xf32>
    %c0_7 = arith.constant 0 : index
    %c0_8 = arith.constant 0 : index
    %20 = vector.load %arg3[%c0_7, %c0_8] : memref<1x32xf32, #tpu.memory_space<vmem>>, vector<1x32xf32>
    %21 = vector.broadcast %20 : vector<1x32xf32> to vector<8x32xf32>
    %22 = arith.mulf %21, %19 : vector<8x32xf32>
    %c0_9 = arith.constant 0 : index
    %c0_10 = arith.constant 0 : index
    %23 = vector.load %arg4[%c0_9, %c0_10] : memref<8x32xf32, #tpu.memory_space<vmem>>, vector<8x32xf32>
    tpu.vector_store %arg4[%c0_9, %c0_10], %22 {strides = array<i32>} : memref<8x32xf32, #tpu.memory_space<vmem>>, vector<8x32xf32>,
    return
  }
  func.func @transform_0(%arg0: i32) -> (i32, i32) {
    %c0_i32 = arith.constant 0 : i32
    %c0_i32_0 = arith.constant 0 : i32
    return %arg0, %c0_i32 : i32, i32
  }
  func.func @transform_1(%arg0: i32) -> (i32, i32) {
    %c0_i32 = arith.constant 0 : i32
    %c0_i32_0 = arith.constant 0 : i32
    return %arg0, %c0_i32 : i32, i32
  }
  func.func @transform_2(%arg0: i32) -> (i32, i32) {
    %c0_i32 = arith.constant 0 : i32
    %c0_i32_0 = arith.constant 0 : i32
    %c0_i32_1 = arith.constant 0 : i32
    return %c0_i32, %c0_i32_0 : i32, i32
  }
  func.func @transform_3(%arg0: i32) -> (i32, i32) {
    %c0_i32 = arith.constant 0 : i32
    %c0_i32_0 = arith.constant 0 : i32
    return %arg0, %c0_i32 : i32, i32
  }
}

</mosaic_0001>

<llo_original>
// kernel: tpu_custom_call.1
$region0: #{tpu_custom_call.1}
  #allocation0 [shape = 'u32[]', space=smem, size = 0x4, offset = 0x4, fixed_abs, tag = 'smem constant byte address 0x4 - core index']
  #allocation1 [shape = 'u32[144,128]{1,0:T(1,128)}', space=vmem, size = 0x12000, scoped, tag = 'internal scratch']
  %s0 = inlined_call_operand.hbm [shape: f32[16,32], index: 0, kind: input, shape index: {}]
  %s1 = inlined_call_operand.hbm [shape: f32[16,32], index: 1, kind: input, shape index: {}]
  %s2 = inlined_call_operand.vmem [shape: f32[1,32], index: 2, kind: input, shape index: {}]
  %s3 = inlined_call_operand.hbm [shape: f32[16,32], index: 3, kind: output, shape index: {}]
  %s4 = sld [smem:[#allocation0]]
  $region53: #{tpu_custom_call.1} parent=0
    _
  %s6 = ssub.s32 1, %s4
  %s7 = scalar_select 0, %s6, %s4
  $region1: #{tpu_custom_call.1} parent=0
    #allocation2 [shape = 'u8[8192]{0}', space=vmem, size = 0x2000, scoped, tag = 'input window, operand 0']
    #allocation3 [shape = 's32[2]{0}', space=sflag, size = 0x8, scoped, tag = 'scoped memory for tpu_custom_call.1']
    #allocation4 [shape = 's32[2]{0}', space=sflag, size = 0x8, scoped, tag = 'scoped memory for tpu_custom_call.1']
    #allocation5 [shape = 'u8[8192]{0}', space=vmem, size = 0x2000, scoped, tag = 'input window, operand 1']
    #allocation6 [shape = 's32[2]{0}', space=sflag, size = 0x8, scoped, tag = 'scoped memory for tpu_custom_call.1']
    #allocation7 [shape = 'u8[8192]{0}', space=vmem, size = 0x2000, scoped, tag = 'output window, operand 0']
    %8 = vsyncpa [#allocation3], 0
    %s9 = scalar_lea.sflag [#allocation3], 1
    %10 = vsyncpa %s9, 0
    %11 = vsyncpa [#allocation6], 0
    %s12 = scalar_lea.sflag [#allocation6], 1
    %13 = vsyncpa %s12, 0
    %14 = vsyncpa [#allocation4], 0
    %s15 = scalar_lea.sflag [#allocation4], 1
    %16 = vsyncpa %s15, 0
    loop: start=0, step=1, limit=4
    $region2: #{tpu_custom_call.1} parent=1 // loop_pre_header
      _
    $region3: #{tpu_custom_call.1} parent=1 // loop_header
      %s18 = sphi 0, %s22
      %p19 = scmp.ge.s32.totalorder %s18, 4
      %s28 = sphi 0, %s30
      %s31 = sphi 0, %s28
      %s32 = sphi 0, %s31
      %s48 = sphi 0, %s32
      %s54 = sphi 0, %s56
      %s57 = sphi 0, %s54
      %s58 = sphi 0, %s57
      %s74 = sphi 0, %s58
      %s78 = sphi 0, %s78
      %s80 = sphi 0, %s78
      %s81 = sphi 0, %s80
      %s95 = sphi 0, %s81
      %s101 = sphi 0, %s103
      %s104 = sphi 0, %s101
      %s105 = sphi 0, %s104
      %s121 = sphi 0, %s105
    $region4: #{tpu_custom_call.1} parent=1 // loop_header_branch
      %21 = sbr.rel (%p19) target = $region8
    $region5: #{tpu_custom_call.1} parent=1 // loop_body
      %s23 = ssub.s32 %s18, 1
      %s24 = ssub.s32 %s18, 2
      %s25 = sadd.s32 %s18, 1
      %s26 = ssub.s32 %s18, %s25
      %p27 = scmp.eq.s32.totalorder %s26, 0
      %s29 = sadd.s32 %s28, 1
      %s30 = scalar_select %p27, %s28, %s29
      %p33 = pneg %p27
      %p34 = scmp.eq.s32.totalorder %s18, 1
      %p35 = por %p33, %p34
      %p36 = scmp.ne.s32.totalorder %s28, %s31
      %p37 = scmp.eq.s32.totalorder %s18, 0
      %p38 = por %p36, %p37
      %p39 = scmp.ne.s32.totalorder %s28, %s31
      %p40 = scmp.eq.s32.totalorder %s23, 1
      %p41 = por %p39, %p40
      %p42 = scmp.ne.s32.totalorder %s31, %s32
      %p43 = scmp.eq.s32.totalorder %s23, 0
      %p44 = por %p42, %p43
      %p45 = scmp.ne.s32.totalorder %s31, %s32
      %p46 = scmp.eq.s32.totalorder %s24, 1
      %p47 = por %p45, %p46
      %p49 = scmp.ne.s32.totalorder %s32, %s48
      %p50 = scmp.eq.s32.totalorder %s24, 0
      %p51 = por %p49, %p50
      %s52 = ssub.s32 %s18, %s25
      %p53 = scmp.eq.s32.totalorder %s52, 0
      %s55 = sadd.s32 %s54, 1
      %s56 = scalar_select %p53, %s54, %s55
      %p59 = pneg %p53
      %p60 = scmp.eq.s32.totalorder %s18, 1
      %p61 = por %p59, %p60
      %p62 = scmp.ne.s32.totalorder %s54, %s57
      %p63 = scmp.eq.s32.totalorder %s18, 0
      %p64 = por %p62, %p63
      %p65 = scmp.ne.s32.totalorder %s54, %s57
      %p66 = scmp.eq.s32.totalorder %s23, 1
      %p67 = por %p65, %p66
      %p68 = scmp.ne.s32.totalorder %s57, %s58
      %p69 = scmp.eq.s32.totalorder %s23, 0
      %p70 = por %p68, %p69
      %p71 = scmp.ne.s32.totalorder %s57, %s58
      %p72 = scmp.eq.s32.totalorder %s24, 1
      %p73 = por %p71, %p72
      %p75 = scmp.ne.s32.totalorder %s58, %s74
      %p76 = scmp.eq.s32.totalorder %s24, 0
      %p77 = por %p75, %p76
      %s79 = sadd.s32 %s78, 1
      %p82 = scmp.eq.s32.totalorder %s18, 1
      %p83 = scmp.ne.s32.totalorder %s78, %s80
      %p84 = scmp.eq.s32.totalorder %s18, 0
      %p85 = por %p83, %p84
      %p86 = scmp.ne.s32.totalorder %s78, %s80
      %p87 = scmp.eq.s32.totalorder %s23, 1
      %p88 = por %p86, %p87
      %p89 = scmp.ne.s32.totalorder %s80, %s81
      %p90 = scmp.eq.s32.totalorder %s23, 0
      %p91 = por %p89, %p90
      %p92 = scmp.ne.s32.totalorder %s80, %s81
      %p93 = scmp.eq.s32.totalorder %s24, 1
      %p94 = por %p92, %p93
      %p96 = scmp.ne.s32.totalorder %s81, %s95
      %p97 = scmp.eq.s32.totalorder %s24, 0
      %p98 = por %p96, %p97
      %s99 = ssub.s32 %s18, %s25
      %p100 = scmp.eq.s32.totalorder %s99, 0
      %s102 = sadd.s32 %s101, 1
      %s103 = scalar_select %p100, %s101, %s102
      %p106 = pneg %p100
      %p107 = scmp.eq.s32.totalorder %s18, 1
      %p108 = por %p106, %p107
      %p109 = scmp.ne.s32.totalorder %s101, %s104
      %p110 = scmp.eq.s32.totalorder %s18, 0
      %p111 = por %p109, %p110
      %p112 = scmp.ne.s32.totalorder %s101, %s104
      %p113 = scmp.eq.s32.totalorder %s23, 1
      %p114 = por %p112, %p113
      %p115 = scmp.ne.s32.totalorder %s104, %s105
      %p116 = scmp.eq.s32.totalorder %s23, 0
      %p117 = por %p115, %p116
      %p118 = scmp.ne.s32.totalorder %s104, %s105
      %p119 = scmp.eq.s32.totalorder %s24, 1
      %p120 = por %p118, %p119
      %p122 = scmp.ne.s32.totalorder %s105, %s121
      %p123 = scmp.eq.s32.totalorder %s24, 0
      %p124 = por %p122, %p123
      %p125 = scmp.le.s32.totalorder 1, %s18
      %p126 = scmp.lt.s32.totalorder %s18, 3
      %p127 = pnand %p125, %p126
      %p128 = pneg %p127
      // Predicated region
      $region9: #{tpu_custom_call.1} parent=5 // pred_check
        _
      $region10: #{tpu_custom_call.1} parent=5 // pred_check_branch
        %130 = sbr.rel (%p127) target = $region12
      $region11: #{tpu_custom_call.1} parent=5 // pred_region
        %s131 = ssub.s32 %s18, 1
        // Predicated region
        $region13: #{tpu_custom_call.1} parent=11 // pred_check
          %p132 = pneg %p91
        $region14: #{tpu_custom_call.1} parent=11 // pred_check_branch
          %134 = sbr.rel (%p132) target = $region16
        $region15: #{tpu_custom_call.1} parent=11 // pred_region
          _
        $region16: #{tpu_custom_call.1} parent=11 // pred_fallthru
          _
      $region12: #{tpu_custom_call.1} parent=5 // pred_fallthru
        _
      %p135 = scmp.lt.s32.totalorder %s18, 2
      // Predicated region
      $region17: #{tpu_custom_call.1} parent=5 // pred_check
        %p136 = pneg %p135
      $region18: #{tpu_custom_call.1} parent=5 // pred_check_branch
        %138 = sbr.rel (%p136) target = $region20
      $region19: #{tpu_custom_call.1} parent=5 // pred_region
        // Predicated region
        $region21: #{tpu_custom_call.1} parent=19 // pred_check
          %p139 = pneg %p38
        $region22: #{tpu_custom_call.1} parent=19 // pred_check_branch
          %141 = sbr.rel (%p139) target = $region24
        $region23: #{tpu_custom_call.1} parent=19 // pred_region
          %s142 = sand.u32 %s28, 1
          %s143 = scalar_lea.sflag [#allocation3], %s142
          %s144 = sand.u32 %s28, 1
          %s145 = smul.addr %s144, 8
          %s146 = scalar_lea.vmem [#allocation2], %s145
          %s148 = ssub.s32 128, 128
          %149 = vsyncadd %s143, %s148
          %s150 = smul.addr %s18, 128
          %s151 = scalar_lea.hbm %s0, %s150
          %s153 = sshll.u32 %s146, 4
          %s154 = int_to_ptr.vmem [resolvable:$true] %s153
          %156 = dma.hbm_to_vmem [thread:$0]  %s151, 128, %s154, %s143
        $region24: #{tpu_custom_call.1} parent=19 // pred_fallthru
          _
        // Predicated region
        $region25: #{tpu_custom_call.1} parent=19 // pred_check
          %p157 = pneg %p64
        $region26: #{tpu_custom_call.1} parent=19 // pred_check_branch
          %159 = sbr.rel (%p157) target = $region28
        $region27: #{tpu_custom_call.1} parent=19 // pred_region
          %s160 = sand.u32 %s54, 1
          %s161 = scalar_lea.sflag [#allocation6], %s160
          %s162 = sand.u32 %s54, 1
          %s163 = smul.addr %s162, 8
          %s164 = scalar_lea.vmem [#allocation5], %s163
          %s166 = ssub.s32 128, 128
          %167 = vsyncadd %s161, %s166
          %s168 = smul.addr %s18, 128
          %s169 = scalar_lea.hbm %s1, %s168
          %s171 = sshll.u32 %s164, 4
          %s172 = int_to_ptr.vmem [resolvable:$true] %s171
          %174 = dma.hbm_to_vmem [thread:$0]  %s169, 128, %s172, %s161
        $region28: #{tpu_custom_call.1} parent=19 // pred_fallthru
          _
      $region20: #{tpu_custom_call.1} parent=5 // pred_fallthru
        _
      %p175 = scmp.le.s32.totalorder 1, %s18
      %p176 = scmp.lt.s32.totalorder %s18, 3
      %p177 = pnand %p175, %p176
      %p178 = pneg %p177
      // Predicated region
      $region29: #{tpu_custom_call.1} parent=5 // pred_check
        _
      $region30: #{tpu_custom_call.1} parent=5 // pred_check_branch
        %180 = sbr.rel (%p177) target = $region32
      $region31: #{tpu_custom_call.1} parent=5 // pred_region
        %s181 = ssub.s32 %s18, 1
        %s182 = sand.u32 %s31, 1
        %s183 = scalar_lea.sflag [#allocation3], %s182
        %s184 = sand.u32 %s31, 1
        %s185 = smul.addr %s184, 8
        %s186 = scalar_lea.vmem [#allocation2], %s185
        // Predicated region
        $region33: #{tpu_custom_call.1} parent=31 // pred_check
          %p187 = pneg %p44
        $region34: #{tpu_custom_call.1} parent=31 // pred_check_branch
          %189 = sbr.rel (%p187) target = $region36
        $region35: #{tpu_custom_call.1} parent=31 // pred_region
          %190 = dma.done %s183, 128
        $region36: #{tpu_custom_call.1} parent=31 // pred_fallthru
          _
        %s191 = sand.u32 %s57, 1
        %s192 = scalar_lea.sflag [#allocation6], %s191
        %s193 = sand.u32 %s57, 1
        %s194 = smul.addr %s193, 8
        %s195 = scalar_lea.vmem [#allocation5], %s194
        // Predicated region
        $region37: #{tpu_custom_call.1} parent=31 // pred_check
          %p196 = pneg %p70
        $region38: #{tpu_custom_call.1} parent=31 // pred_check_branch
          %198 = sbr.rel (%p196) target = $region40
        $region39: #{tpu_custom_call.1} parent=31 // pred_region
          %199 = dma.done %s192, 128
        $region40: #{tpu_custom_call.1} parent=31 // pred_fallthru
          _
        %s200 = sand.u32 %s31, 1
        %s201 = scalar_lea.sflag [#allocation3], %s200
        %s202 = sand.u32 %s31, 1
        %s203 = smul.addr %s202, 8
        %s204 = scalar_lea.vmem [#allocation2], %s203
        %p205 = pneg %p44
        %p206 = pneg %p41
        %s207 = sand.u32 %s57, 1
        %s208 = scalar_lea.sflag [#allocation6], %s207
        %s209 = sand.u32 %s57, 1
        %s210 = smul.addr %s209, 8
        %s211 = scalar_lea.vmem [#allocation5], %s210
        %p212 = pneg %p70
        %p213 = pneg %p67
        %p214 = pneg %p91
        %p215 = pneg %p88
        %p216 = pneg %p117
        %p217 = pneg %p114
        %s218 = sand.u32 %s104, 1
        %s219 = scalar_lea.sflag [#allocation4], %s218
        %s220 = sand.u32 %s104, 1
        %s221 = smul.addr %s220, 8
        %s222 = scalar_lea.vmem [#allocation7], %s221
        %v223 = vld [vmem:[%s186] sm:$0xff]
        %v224 = vld [vmem:[%s195] sm:$0xff]
        %v225 = vsub.f32 0.0, %v224
        %v226 = vmul.f32 %v225, 1.442695
        %v227 = vpow.pop %v226
        %v228 = vadd.f32 %v227, 1.0
        %v229 = vrcp.pop %v228
        %v230 = vmul.f32 %v224, %v229
        %v231 = vmul.f32 %v223, %v230
        %v232 = vmul.f32 %v231, %v231
        %vm233 = vcmask 261120
        %v234 = vsel %vm233, %v232, 0.0
        %235 = vadd.xlane.f32.xlu0 %v234
        %v236 = vpop.xlane.xlu0 %235
        %v237 = vmul.f32 %v236, 0.03125
        %v238 = vadd.f32 %v237, 1e-06
        %v239 = vrsqrt.pop %v238
        %v240 = vmul.f32 %v231, %v239
        %v241 = vld [vmem:[%s2] sm:$0x1]
        %v243 = vlaneseq
        %v244 = vshrl.u32 %v243, 7
        %v245 = vsub.s32 0, %v244
        %v246 = vrot.slane %v241, %v245
        %v248 = vmul.f32 %v246, %v240
        %249 = vst.msk [vmem:[%s222] sm:$0xff] %vm233, %v248
        %s250 = sand.u32 %s104, 1
        %s251 = scalar_lea.sflag [#allocation4], %s250
        %s252 = sand.u32 %s104, 1
        %s253 = smul.addr %s252, 8
        %s254 = scalar_lea.vmem [#allocation7], %s253
        // Predicated region
        $region41: #{tpu_custom_call.1} parent=31 // pred_check
          %p255 = pneg %p114
        $region42: #{tpu_custom_call.1} parent=31 // pred_check_branch
          %257 = sbr.rel (%p255) target = $region44
        $region43: #{tpu_custom_call.1} parent=31 // pred_region
          %s259 = ssub.s32 128, 128
          %260 = vsyncadd %s251, %s259
          %s261 = smul.addr %s23, 128
          %s262 = scalar_lea.hbm %s3, %s261
          %s264 = sshll.u32 %s254, 4
          %s265 = int_to_ptr.vmem [resolvable:$true] %s264
          %267 = dma.vmem_to_hbm [thread:$0]  %s265, 128, %s262, %s251
        $region44: #{tpu_custom_call.1} parent=31 // pred_fallthru
          _
      $region32: #{tpu_custom_call.1} parent=5 // pred_fallthru
        _
      %p268 = scmp.le.s32.totalorder 2, %s18
      // Predicated region
      $region45: #{tpu_custom_call.1} parent=5 // pred_check
        %p269 = pneg %p268
      $region46: #{tpu_custom_call.1} parent=5 // pred_check_branch
        %271 = sbr.rel (%p269) target = $region48
      $region47: #{tpu_custom_call.1} parent=5 // pred_region
        %s272 = ssub.s32 %s18, 2
        // Predicated region
        $region49: #{tpu_custom_call.1} parent=47 // pred_check
          %p273 = pneg %p120
        $region50: #{tpu_custom_call.1} parent=47 // pred_check_branch
          %275 = sbr.rel (%p273) target = $region52
        $region51: #{tpu_custom_call.1} parent=47 // pred_region
          %s276 = sand.u32 %s105, 1
          %s277 = scalar_lea.sflag [#allocation4], %s276
          %s278 = sand.u32 %s105, 1
          %s279 = smul.addr %s278, 8
          %s280 = scalar_lea.vmem [#allocation7], %s279
          %281 = dma.done %s277, 128
        $region52: #{tpu_custom_call.1} parent=47 // pred_fallthru
          _
      $region48: #{tpu_custom_call.1} parent=5 // pred_fallthru
        _
    $region6: #{tpu_custom_call.1} parent=1 // loop_footer
      %s22 = sadd.s32 1, %s18
    $region7: #{tpu_custom_call.1} parent=1 // loop_footer_branch
      %17 = sbr.rel target = $region3
    $region8: #{tpu_custom_call.1} parent=1 // loop_exit
      _
    %282 = vsyncpa [#allocation3], 1
    %s283 = scalar_lea.sflag [#allocation3], 1
    %284 = vsyncpa %s283, 1
    %285 = vsyncpa [#allocation6], 1
    %s286 = scalar_lea.sflag [#allocation6], 1
    %287 = vsyncpa %s286, 1
    %288 = vsyncpa [#allocation4], 1
    %s289 = scalar_lea.sflag [#allocation4], 1
    %290 = vsyncpa %s289, 1

</llo_original>
